<compile_context>
chip_gen: v5e
topology: v5e:2x2
jax: 0.10.0
libtpu: 0.0.40
codegen_flags: <defaults>
</compile_context>

<pallas_src>
import functools

import jax
import jax.numpy as jnp
from jax.experimental import pallas as pl
from jax.experimental.pallas import tpu as pltpu


# ---------------------------------------------------------------------------
# Generation-aware VMEM budgets (v5e/v6e: 128 MiB, v7x: 64 MiB per TensorCore).
# ---------------------------------------------------------------------------
def _vmem_budgets():
    vmem = 64 * 1024 * 1024          # conservative fallback == v7x per-core VMEM
    try:
        info = pltpu.get_tpu_info()
        vmem = int(getattr(info, "vmem_capacity_bytes", vmem))
    except Exception:
        pass
    limit = min((vmem * 3) // 4, 100 * 1024 * 1024)   # headroom for Mosaic scratch
    per_buffer = (limit * 2) // 5                     # per A buffer (x2 double-buffered)
    return int(limit), int(per_buffer)


_VMEM_LIMIT_BYTES, _A_BUFFER_BUDGET = _vmem_budgets()
_LANES = 128


def _pad_to_lanes(c):
    return ((c + _LANES - 1) // _LANES) * _LANES


def _pad_cols(x, cols):
    pad = cols - x.shape[-1]
    if pad == 0:
        return x
    return jnp.pad(x, ((0, 0), (0, pad)))


def _largest_divisor_tile(n, align, cap):
    """Largest multiple of `align` dividing n and <= cap; None if impossible."""
    if n % align != 0:
        return None
    t = min(n, (int(cap) // align) * align)
    while t >= align:
        if n % t == 0:
            return t
        t -= align
    return None


def _pick_tiles(n_dst, n_k, elem_bytes, budget, extra_rows):
    """Pick (dst, K) tile sizes so the A (tile_d, tile_k) buffer plus the
    matching XW (tile_k, Cp) buffer fit the per-buffer VMEM budget."""
    min_dst = 8 if n_dst % 8 == 0 else n_dst

    def fits(td, tk):
        return (td + extra_rows) * tk * elem_bytes <= budget

    # K (lane) axis: prefer full extent (single pass, no output revisits);
    # otherwise the largest 128-multiple that fits.  If n_k is not a
    # 128-multiple, full extent is the only legal block anyway.
    if n_k % 128 != 0 or fits(min_dst, n_k):
        tile_k = n_k
    else:
        cap = budget // ((min_dst + extra_rows) * elem_bytes)
        tile_k = _largest_divisor_tile(n_k, 128, cap) or n_k

    # dst (sublane) axis: biggest 8-multiple keeping the block in budget.
    cap = max(budget // (tile_k * elem_bytes) - extra_rows, 8)
    tile_d = _largest_divisor_tile(n_dst, 8, cap) or n_dst
    return tile_d, tile_k


# ---------------------------------------------------------------------------
# Basis combination: w = att @ basis_flat  ((R,B)@(B,Cin*Cout)) -- tiny, plain
# XLA under jit (a dedicated pallas_call here is pure launch/DMA overhead).
# ---------------------------------------------------------------------------
def combine_bases(att, basis):
    R, B = att.shape
    _, Cin, Cout = basis.shape
    w = jnp.dot(att, basis.reshape(B, Cin * Cout),
                preferred_element_type=jnp.float32,
                precision=jax.lax.Precision.HIGHEST)
    return w.reshape(R, Cin, Cout)


# ---------------------------------------------------------------------------
# Relational SPMV with the relation axis folded into the MXU contraction.
#   out = A_stacked @ XW_stacked + self_term      (+ fused activation)
#   A_stacked : (N, K) bf16, K = R * N  (dst-major)
#   XW_stacked: (K, Cp) bf16  (channel axis zero-padded to Cp lanes)
#   self_term : (N, Cp) f32   (root term + bias, zero-padded)
# grid = (num_dst_tiles, num_k_tiles); dst "parallel", K "arbitrary" reduction.
# The output block itself is the f32 accumulator.
# ---------------------------------------------------------------------------
def _rgcn_spmv_kernel(a_ref, xw_ref, self_ref, o_ref, *, activation, valid_cols):
    k = pl.program_id(1)
    # bf16 x bf16 straight into the MXU, f32 accumulation (no VPU upcast).
    part = jnp.dot(a_ref[...], xw_ref[...], preferred_element_type=jnp.float32)

    @pl.when(k == 0)
    def _():
        o_ref[...] = part

    @pl.when(k > 0)
    def _():
        o_ref[...] += part

    @pl.when(k == pl.num_programs(1) - 1)
    def _():
        out = o_ref[...] + self_ref[...]
        if activation == "relu":
            out = jnp.maximum(out, 0.0)
        elif activation == "log_softmax":
            if valid_cols < out.shape[-1]:
                lane = jax.lax.broadcasted_iota(jnp.int32, out.shape, 1)
                out = jnp.where(lane < valid_cols, out, -jnp.inf)
            m = jnp.max(out, axis=-1, keepdims=True)
            s = out - m
            out = s - jnp.log(jnp.sum(jnp.exp(s), axis=-1, keepdims=True))
        o_ref[...] = out.astype(o_ref.dtype)


def rgcn_spmv_layer(adj_stacked, xw_stacked, self_term, *, activation,
                    valid_cols):
    """Returns (N, Cp) f32; padded lanes are 0 (relu) / -inf (log_softmax)."""
    N, K = adj_stacked.shape
    Cp = xw_stacked.shape[-1]

    tile_d, tile_k = _pick_tiles(N, K, adj_stacked.dtype.itemsize,
                                 _A_BUFFER_BUDGET, extra_rows=Cp)
    grid = (N // tile_d, K // tile_k)

    kernel = functools.partial(_rgcn_spmv_kernel, activation=activation,
                               valid_cols=valid_cols)

    flops = 2 * N * K * Cp + 6 * N * Cp
    transcendentals = N * Cp if activation == "log_softmax" else 0
    bytes_accessed = (N * K * adj_stacked.dtype.itemsize
                      + grid[0] * K * Cp * xw_stacked.dtype.itemsize
                      + N * Cp * 4            # self term
                      + N * Cp * 4)           # output

    return pl.pallas_call(
        kernel,
        out_shape=jax.ShapeDtypeStruct((N, Cp), jnp.float32),
        grid_spec=pltpu.PrefetchScalarGridSpec(
            num_scalar_prefetch=0,
            grid=grid,
            in_specs=[
                pl.BlockSpec((tile_d, tile_k), lambda i, k: (i, k)),  # A tile
                pl.BlockSpec((tile_k, Cp), lambda i, k: (k, 0)),      # XW tile
                pl.BlockSpec((tile_d, Cp), lambda i, k: (i, 0)),      # self+bias
            ],
            out_specs=pl.BlockSpec((tile_d, Cp), lambda i, k: (i, 0)),  # acc
        ),
        compiler_params=pltpu.CompilerParams(
            dimension_semantics=("parallel", "arbitrary"),
            vmem_limit_bytes=_VMEM_LIMIT_BYTES),
        cost_estimate=pl.CostEstimate(flops=flops,
                                      transcendentals=transcendentals,
                                      bytes_accessed=bytes_accessed),
    )(adj_stacked, xw_stacked, self_term)


# ---------------------------------------------------------------------------
# Parameter init matching torch_geometric's `uniform(size, tensor)`:
# bound = 1/sqrt(num_bases * in_channels), U(-bound, bound).
# ---------------------------------------------------------------------------
def init_conv_params(key, in_channels, out_channels, num_relations, num_bases):
    size = num_bases * in_channels
    bound = 1.0 / jnp.sqrt(jnp.float32(size))
    k1, k2, k3, k4 = jax.random.split(key, 4)
    basis = jax.random.uniform(k1, (num_bases, in_channels, out_channels),
                               jnp.float32, -bound, bound)
    att = jax.random.uniform(k2, (num_relations, num_bases),
                             jnp.float32, -bound, bound)
    root = jax.random.uniform(k3, (in_channels, out_channels),
                              jnp.float32, -bound, bound)
    bias = jax.random.uniform(k4, (out_channels,), jnp.float32, -bound, bound)
    return dict(basis=basis, att=att, root=root, bias=bias)


def rgcn_spmv_forward(adj, params1, params2):
    """Full RGCNSPMV forward: conv1(None) -> relu -> conv2 -> log_softmax."""
    R, N, _ = adj.shape
    # featureless conv1 requires node-id one-hot features, i.e. in_channels == N
    assert params1["root"].shape[0] == N, "conv1 in_channels must equal num_nodes"

    hidden = params1["root"].shape[1]
    out_ch = params2["root"].shape[1]
    Cp1 = _pad_to_lanes(hidden)
    Cp2 = _pad_to_lanes(out_ch)

    # A stacked dst-major and cast to bf16 ONCE; streamed by both layers.
    adj_stacked = adj.transpose(1, 0, 2).reshape(N, R * N).astype(jnp.bfloat16)

    # ---- layer 1 (featureless: x == I => x@w1[r] == w1[r], x@root == root) --
    w1 = combine_bases(params1["att"], params1["basis"])          # (R, N, hidden)
    xw1 = _pad_cols(w1.reshape(R * N, hidden), Cp1).astype(jnp.bfloat16)
    self1 = _pad_cols(params1["root"] + params1["bias"], Cp1).astype(jnp.float32)
    h_pad = rgcn_spmv_layer(adj_stacked, xw1, self1,
                            activation="relu", valid_cols=hidden)
    h = h_pad[:, :hidden]                                         # (N, hidden)

    # ---- layer 2: one fused XLA matmul for the per-relation transform -------
    w2 = combine_bases(params2["att"], params2["basis"])          # (R, hidden, out)
    w2_mat = w2.transpose(1, 0, 2).reshape(hidden, R * out_ch)
    xw2 = jnp.dot(h, w2_mat, preferred_element_type=jnp.float32,
                  precision=jax.lax.Precision.HIGHEST)            # (N, R*out)
    xw2 = xw2.reshape(N, R, out_ch).transpose(1, 0, 2).reshape(R * N, out_ch)
    xw2 = _pad_cols(xw2, Cp2).astype(jnp.bfloat16)
    self2 = jnp.dot(h, params2["root"], preferred_element_type=jnp.float32,
                    precision=jax.lax.Precision.HIGHEST) + params2["bias"]
    self2 = _pad_cols(self2, Cp2).astype(jnp.float32)

    out_pad = rgcn_spmv_layer(adj_stacked, xw2, self2,
                              activation="log_softmax", valid_cols=out_ch)
    return out_pad[:, :out_ch]


# ---------------------------------------------------------------------------
# Pure-JAX reference (same math, same bf16 quantization of A / XW, no Pallas).
# ---------------------------------------------------------------------------
def _ref_forward(adj, params1, params2):
    hp = jax.lax.Precision.HIGHEST
    a = adj.astype(jnp.bfloat16).astype(jnp.float32)
    w1 = combine_bases(params1["att"], params1["basis"])
    xw1 = w1.astype(jnp.bfloat16).astype(jnp.float32)
    h = (jnp.einsum("rvu,ruo->vo", a, xw1, precision=hp)
         + params1["root"] + params1["bias"])
    h = jax.nn.relu(h)
    w2 = combine_bases(params2["att"], params2["basis"])
    xw2 = jnp.einsum("vc,rco->rvo", h, w2, precision=hp)
    xw2 = xw2.astype(jnp.bfloat16).astype(jnp.float32)
    out = (jnp.einsum("rvu,ruo->vo", a, xw2, precision=hp)
           + jnp.dot(h, params2["root"], precision=hp) + params2["bias"])
    return jax.nn.log_softmax(out, axis=1)


if __name__ == "__main__":
    # Small deterministic problem: featureless RGCN => num_nodes == in_channels.
    num_nodes = 16            # == in_channels of conv1
    hidden = 16               # fixed by RGCNSPMV (conv1 out_channels = 16)
    out_channels = 8
    num_relations = 4
    num_bases = 30
    num_edges = 64

    key = jax.random.PRNGKey(0)
    kg1, kg2, kg3, kp1, kp2 = jax.random.split(key, 5)

    # Synthetic graph: (src, dst, type), norm = 1 / in_degree(dst).
    src = jax.random.randint(kg1, (num_edges,), 0, num_nodes)
    dst = jax.random.randint(kg2, (num_edges,), 0, num_nodes)
    etype = jax.random.randint(kg3, (num_edges,), 0, num_relations)
    in_deg = jnp.zeros((num_nodes,), jnp.float32).at[dst].add(1.0)
    norm = 1.0 / jnp.maximum(in_deg[dst], 1.0)

    # Dense per-relation adjacency A[r, dst, src] += norm.
    adj = jnp.zeros((num_relations, num_nodes, num_nodes), jnp.float32)
    adj = adj.at[etype, dst, src].add(norm)

    params1 = init_conv_params(kp1, num_nodes, hidden, num_relations, num_bases)
    params2 = init_conv_params(kp2, hidden, out_channels, num_relations,
                               num_bases)

    fwd = jax.jit(rgcn_spmv_forward)
    out = jax.block_until_ready(fwd(adj, params1, params2))

    ref = jax.block_until_ready(_ref_forward(adj, params1, params2))
    assert out.shape == (num_nodes, out_channels)
    assert jnp.allclose(out, ref, atol=2e-3, rtol=2e-3), "mismatch vs reference"

    print("KERNEL_OK")
</pallas_src>

<mosaic_0001>
module attributes {stable_mosaic.version = 11 : i64} {
  func.func @_rgcn_spmv_kernel(%arg0: i32, %arg1: i32, %arg2: memref<16x64xbf16, #tpu.memory_space<vmem>>, %arg3: memref<64x128xbf16, #tpu.memory_space<vmem>>, %arg4: memref<16x128xf32, #tpu.memory_space<vmem>>, %arg5: memref<16x128xf32, #tpu.memory_space<vmem>>) attributes {dimension_semantics = [#tpu.dimension_semantics<parallel>, #tpu.dimension_semantics<arbitrary>], iteration_bounds = array<i64: 1, 1>, scalar_prefetch = 0 : i64, scratch_operands = 0 : i64, tpu.core_type = #tpu.core_type<tc>, window_params = [{transform_indices = @transform_0, window_bounds = array<i64: 16, 64>}, {transform_indices = @transform_1, window_bounds = array<i64: 64, 128>}, {transform_indices = @transform_2, window_bounds = array<i64: 16, 128>}, {transform_indices = @transform_3, window_bounds = array<i64: 16, 128>}]} {
    %c0 = arith.constant 0 : index
    %c0_0 = arith.constant 0 : index
    %0 = vector.load %arg2[%c0, %c0_0] : memref<16x64xbf16, #tpu.memory_space<vmem>>, vector<16x64xbf16>
    %c0_1 = arith.constant 0 : index
    %c0_2 = arith.constant 0 : index
    %1 = vector.load %arg3[%c0_1, %c0_2] : memref<64x128xbf16, #tpu.memory_space<vmem>>, vector<64x128xbf16>
    %cst = arith.constant dense<0.000000e+00> : vector<16x128xf32>
    %2 = tpu.matmul %0, %1, %cst {dimension_numbers = #tpu.dot_dimension_numbers<[1], [0], [0], [1], [0, 0, 1, 1], [], []>} : vector<16x64xbf16>, vector<64x128xbf16>, vector<16x128xf32> -> vector<16x128xf32>
    %c0_i32 = arith.constant 0 : i32
    %3 = arith.cmpi eq, %arg1, %c0_i32 : i32
    %4 = arith.extui %3 : i1 to i32
    %c0_i32_3 = arith.constant 0 : i32
    %5 = arith.cmpi ne, %4, %c0_i32_3 : i32
    scf.if %5 {
      %c0_8 = arith.constant 0 : index
      %c0_9 = arith.constant 0 : index
      %12 = vector.load %arg5[%c0_8, %c0_9] : memref<16x128xf32, #tpu.memory_space<vmem>>, vector<16x128xf32>
      tpu.vector_store %arg5[%c0_8, %c0_9], %2 {strides = array<i32>} : memref<16x128xf32, #tpu.memory_space<vmem>>, vector<16x128xf32>,
    } else {
    }
    %c0_i32_4 = arith.constant 0 : i32
    %6 = arith.cmpi sgt, %arg1, %c0_i32_4 : i32
    %7 = arith.extui %6 : i1 to i32
    %c0_i32_5 = arith.constant 0 : i32
    %8 = arith.cmpi ne, %7, %c0_i32_5 : i32
    scf.if %8 {
      %c0_8 = arith.constant 0 : index
      %c0_9 = arith.constant 0 : index
      %12 = vector.load %arg5[%c0_8, %c0_9] : memref<16x128xf32, #tpu.memory_space<vmem>>, vector<16x128xf32>
      %13 = arith.addf %12, %2 : vector<16x128xf32>
      %c0_10 = arith.constant 0 : index
      %c0_11 = arith.constant 0 : index
      %14 = vector.load %arg5[%c0_10, %c0_11] : memref<16x128xf32, #tpu.memory_space<vmem>>, vector<16x128xf32>
      tpu.vector_store %arg5[%c0_10, %c0_11], %13 {strides = array<i32>} : memref<16x128xf32, #tpu.memory_space<vmem>>, vector<16x128xf32>,
    } else {
    }
    %c0_i32_6 = arith.constant 0 : i32
    %9 = arith.cmpi eq, %arg1, %c0_i32_6 : i32
    %10 = arith.extui %9 : i1 to i32
    %c0_i32_7 = arith.constant 0 : i32
    %11 = arith.cmpi ne, %10, %c0_i32_7 : i32
    scf.if %11 {
      %c0_8 = arith.constant 0 : index
      %c0_9 = arith.constant 0 : index
      %12 = vector.load %arg5[%c0_8, %c0_9] : memref<16x128xf32, #tpu.memory_space<vmem>>, vector<16x128xf32>
      %c0_10 = arith.constant 0 : index
      %c0_11 = arith.constant 0 : index
      %13 = vector.load %arg4[%c0_10, %c0_11] : memref<16x128xf32, #tpu.memory_space<vmem>>, vector<16x128xf32>
      %14 = arith.addf %12, %13 : vector<16x128xf32>
      %cst_12 = arith.constant 0.000000e+00 : f32
      %15 = vector.broadcast %cst_12 : f32 to vector<16x128xf32>
      %16 = arith.maximumf %14, %15 : vector<16x128xf32>
      %c0_13 = arith.constant 0 : index
      %c0_14 = arith.constant 0 : index
      %17 = vector.load %arg5[%c0_13, %c0_14] : memref<16x128xf32, #tpu.memory_space<vmem>>, vector<16x128xf32>
      tpu.vector_store %arg5[%c0_13, %c0_14], %16 {strides = array<i32>} : memref<16x128xf32, #tpu.memory_space<vmem>>, vector<16x128xf32>,
    } else {
    }
    return
  }
  func.func @transform_0(%arg0: i32, %arg1: i32) -> (i32, i32) {
    %c0_i32 = arith.constant 0 : i32
    return %arg0, %arg1 : i32, i32
  }
  func.func @transform_1(%arg0: i32, %arg1: i32) -> (i32, i32) {
    %c0_i32 = arith.constant 0 : i32
    %c0_i32_0 = arith.constant 0 : i32
    return %arg1, %c0_i32 : i32, i32
  }
  func.func @transform_2(%arg0: i32, %arg1: i32) -> (i32, i32) {
    %c0_i32 = arith.constant 0 : i32
    %c0_i32_0 = arith.constant 0 : i32
    return %arg0, %c0_i32 : i32, i32
  }
  func.func @transform_3(%arg0: i32, %arg1: i32) -> (i32, i32) {
    %c0_i32 = arith.constant 0 : i32
    %c0_i32_0 = arith.constant 0 : i32
    return %arg0, %c0_i32 : i32, i32
  }
}

module attributes {stable_mosaic.version = 11 : i64} {
  func.func @_rgcn_spmv_kernel(%arg0: i32, %arg1: i32, %arg2: memref<16x64xbf16, #tpu.memory_space<vmem>>, %arg3: memref<64x128xbf16, #tpu.memory_space<vmem>>, %arg4: memref<16x128xf32, #tpu.memory_space<vmem>>, %arg5: memref<16x128xf32, #tpu.memory_space<vmem>>) attributes {dimension_semantics = [#tpu.dimension_semantics<parallel>, #tpu.dimension_semantics<arbitrary>], iteration_bounds = array<i64: 1, 1>, scalar_prefetch = 0 : i64, scratch_operands = 0 : i64, tpu.core_type = #tpu.core_type<tc>, window_params = [{transform_indices = @transform_0, window_bounds = array<i64: 16, 64>}, {transform_indices = @transform_1, window_bounds = array<i64: 64, 128>}, {transform_indices = @transform_2, window_bounds = array<i64: 16, 128>}, {transform_indices = @transform_3, window_bounds = array<i64: 16, 128>}]} {
    %c0 = arith.constant 0 : index
    %c0_0 = arith.constant 0 : index
    %0 = vector.load %arg2[%c0, %c0_0] : memref<16x64xbf16, #tpu.memory_space<vmem>>, vector<16x64xbf16>
    %c0_1 = arith.constant 0 : index
    %c0_2 = arith.constant 0 : index
    %1 = vector.load %arg3[%c0_1, %c0_2] : memref<64x128xbf16, #tpu.memory_space<vmem>>, vector<64x128xbf16>
    %cst = arith.constant dense<0.000000e+00> : vector<16x128xf32>
    %2 = tpu.matmul %0, %1, %cst {dimension_numbers = #tpu.dot_dimension_numbers<[1], [0], [0], [1], [0, 0, 1, 1], [], []>} : vector<16x64xbf16>, vector<64x128xbf16>, vector<16x128xf32> -> vector<16x128xf32>
    %c0_i32 = arith.constant 0 : i32
    %3 = arith.cmpi eq, %arg1, %c0_i32 : i32
    %4 = arith.extui %3 : i1 to i32
    %c0_i32_3 = arith.constant 0 : i32
    %5 = arith.cmpi ne, %4, %c0_i32_3 : i32
    scf.if %5 {
      %c0_8 = arith.constant 0 : index
      %c0_9 = arith.constant 0 : index
      %12 = vector.load %arg5[%c0_8, %c0_9] : memref<16x128xf32, #tpu.memory_space<vmem>>, vector<16x128xf32>
      tpu.vector_store %arg5[%c0_8, %c0_9], %2 {strides = array<i32>} : memref<16x128xf32, #tpu.memory_space<vmem>>, vector<16x128xf32>,
    } else {
    }
    %c0_i32_4 = arith.constant 0 : i32
    %6 = arith.cmpi sgt, %arg1, %c0_i32_4 : i32
    %7 = arith.extui %6 : i1 to i32
    %c0_i32_5 = arith.constant 0 : i32
    %8 = arith.cmpi ne, %7, %c0_i32_5 : i32
    scf.if %8 {
      %c0_8 = arith.constant 0 : index
      %c0_9 = arith.constant 0 : index
      %12 = vector.load %arg5[%c0_8, %c0_9] : memref<16x128xf32, #tpu.memory_space<vmem>>, vector<16x128xf32>
      %13 = arith.addf %12, %2 : vector<16x128xf32>
      %c0_10 = arith.constant 0 : index
      %c0_11 = arith.constant 0 : index
      %14 = vector.load %arg5[%c0_10, %c0_11] : memref<16x128xf32, #tpu.memory_space<vmem>>, vector<16x128xf32>
      tpu.vector_store %arg5[%c0_10, %c0_11], %13 {strides = array<i32>} : memref<16x128xf32, #tpu.memory_space<vmem>>, vector<16x128xf32>,
    } else {
    }
    %c0_i32_6 = arith.constant 0 : i32
    %9 = arith.cmpi eq, %arg1, %c0_i32_6 : i32
    %10 = arith.extui %9 : i1 to i32
    %c0_i32_7 = arith.constant 0 : i32
    %11 = arith.cmpi ne, %10, %c0_i32_7 : i32
    scf.if %11 {
      %c0_8 = arith.constant 0 : index
      %c0_9 = arith.constant 0 : index
      %12 = vector.load %arg5[%c0_8, %c0_9] : memref<16x128xf32, #tpu.memory_space<vmem>>, vector<16x128xf32>
      %c0_10 = arith.constant 0 : index
      %c0_11 = arith.constant 0 : index
      %13 = vector.load %arg4[%c0_10, %c0_11] : memref<16x128xf32, #tpu.memory_space<vmem>>, vector<16x128xf32>
      %14 = arith.addf %12, %13 : vector<16x128xf32>
      %15 = tpu.iota {dimensions = array<i32: 1>} : vector<16x128xi32>
      %c8_i32 = arith.constant 8 : i32
      %16 = vector.broadcast %c8_i32 : i32 to vector<16x128xi32>
      %17 = arith.cmpi slt, %15, %16 : vector<16x128xi32>
      %cst_12 = arith.constant 0xFF800000 : f32
      %18 = vector.broadcast %cst_12 : f32 to vector<16x128xf32>
      %19 = arith.select %17, %14, %18 : vector<16x128xi1>, vector<16x128xf32>
      %cst_13 = arith.constant dense<0xFF800000> : vector<16xf32>
      %20 = vector.multi_reduction <maximumf>, %19, %cst_13 [1] : vector<16x128xf32> to vector<16xf32>
      %21 = vector.shape_cast %20 : vector<16xf32> to vector<16x1xf32>
      %22 = vector.broadcast %21 : vector<16x1xf32> to vector<16x128xf32>
      %23 = arith.subf %19, %22 : vector<16x128xf32>
      %24 = math.exp %23 : vector<16x128xf32>
      %cst_14 = arith.constant dense<0.000000e+00> : vector<16xf32>
      %25 = vector.multi_reduction <add>, %24, %cst_14 [1] : vector<16x128xf32> to vector<16xf32>
      %26 = vector.shape_cast %25 : vector<16xf32> to vector<16x1xf32>
      %27 = math.log %26 : vector<16x1xf32>
      %28 = vector.broadcast %27 : vector<16x1xf32> to vector<16x128xf32>
      %29 = arith.subf %23, %28 : vector<16x128xf32>
      %c0_15 = arith.constant 0 : index
      %c0_16 = arith.constant 0 : index
      %30 = vector.load %arg5[%c0_15, %c0_16] : memref<16x128xf32, #tpu.memory_space<vmem>>, vector<16x128xf32>
      tpu.vector_store %arg5[%c0_15, %c0_16], %29 {strides = array<i32>} : memref<16x128xf32, #tpu.memory_space<vmem>>, vector<16x128xf32>,
    } else {
    }
    return
  }
  func.func @transform_0(%arg0: i32, %arg1: i32) -> (i32, i32) {
    %c0_i32 = arith.constant 0 : i32
    return %arg0, %arg1 : i32, i32
  }
  func.func @transform_1(%arg0: i32, %arg1: i32) -> (i32, i32) {
    %c0_i32 = arith.constant 0 : i32
    %c0_i32_0 = arith.constant 0 : i32
    return %arg1, %c0_i32 : i32, i32
  }
  func.func @transform_2(%arg0: i32, %arg1: i32) -> (i32, i32) {
    %c0_i32 = arith.constant 0 : i32
    %c0_i32_0 = arith.constant 0 : i32
    return %arg0, %c0_i32 : i32, i32
  }
  func.func @transform_3(%arg0: i32, %arg1: i32) -> (i32, i32) {
    %c0_i32 = arith.constant 0 : i32
    %c0_i32_0 = arith.constant 0 : i32
    return %arg0, %c0_i32 : i32, i32
  }
}

</mosaic_0001>

<llo_original>
// kernel: rgcn_spmv_forward.2
$region0: #{rgcn_spmv_forward.2}
  #allocation0 [shape = 'u32[]', space=smem, size = 0x4, offset = 0x4, fixed_abs, tag = 'smem constant byte address 0x4 - core index']
  #allocation1 [shape = 'u32[72,128]{1,0:T(1,128)}', space=vmem, size = 0x9000, scoped, tag = 'internal scratch']
  %s0 = inlined_call_operand.vmem [shape: bf16[16,64], index: 0, kind: input, shape index: {}]
  %s1 = inlined_call_operand.vmem [shape: bf16[64,128], index: 1, kind: input, shape index: {}]
  %s2 = inlined_call_operand.vmem [shape: f32[16,128], index: 2, kind: input, shape index: {}]
  %s3 = inlined_call_operand.vmem [shape: f32[16,128], index: 3, kind: output, shape index: {}]
  %s4 = sld [smem:[#allocation0]]
  $region34: #{rgcn_spmv_forward.2} parent=0
    _
  %s6 = ssub.s32 1, %s4
  %s7 = scalar_select 0, %s6, %s4
  // Predicated region
  $region2: #{rgcn_spmv_forward.2} parent=0 // pred_check
    _
  $region3: #{rgcn_spmv_forward.2} parent=0 // pred_check_branch
    %9 = sbr.rel (0) target = $region5
  $region4: #{rgcn_spmv_forward.2} parent=0 // pred_region
    _
  $region5: #{rgcn_spmv_forward.2} parent=0 // pred_fallthru
    _
  // Predicated region
  $region6: #{rgcn_spmv_forward.2} parent=0 // pred_check
    _
  $region7: #{rgcn_spmv_forward.2} parent=0 // pred_check_branch
    %11 = sbr.rel (0) target = $region9
  $region8: #{rgcn_spmv_forward.2} parent=0 // pred_region
    _
  $region9: #{rgcn_spmv_forward.2} parent=0 // pred_fallthru
    _
  // Predicated region
  $region10: #{rgcn_spmv_forward.2} parent=0 // pred_check
    _
  $region11: #{rgcn_spmv_forward.2} parent=0 // pred_check_branch
    %13 = sbr.rel (0) target = $region13
  $region12: #{rgcn_spmv_forward.2} parent=0 // pred_region
    _
  $region13: #{rgcn_spmv_forward.2} parent=0 // pred_fallthru
    _
  %v15 = vld [vmem:[%s0] sm:$0xf]
  %v16 = vld [vmem:[%s0 + $0x4] sm:$0xf]
  %v17 = vld [vmem:[%s1] sm:$0xf]
  %v18 = vld [vmem:[%s1 + $0x4] sm:$0xf]
  %v19 = vld [vmem:[%s1 + $0x8] sm:$0xf]
  %v20 = vld [vmem:[%s1 + $0xc] sm:$0xf]
  %v21 = vld [vmem:[%s1 + $0x10] sm:$0xf]
  %v22 = vld [vmem:[%s1 + $0x14] sm:$0xf]
  %v23 = vld [vmem:[%s1 + $0x18] sm:$0xf]
  %v24 = vld [vmem:[%s1 + $0x1c] sm:$0xf]
  %v27 = vunpack.c.l.b16 %v15
  %v28 = vunpack.c.l.b16 %v16
  %v29 = vpack.c.b16 %v28, %v27
  %v38 = vunpack.c.l.b16 %v17
  %v39 = vunpack.c.l.b16 %v18
  %v40 = vunpack.c.l.b16 %v19
  %v41 = vunpack.c.l.b16 %v20
  %v42 = vunpack.c.l.b16 %v21
  %v43 = vunpack.c.l.b16 %v22
  %v44 = vunpack.c.l.b16 %v23
  %v45 = vunpack.c.l.b16 %v24
  %v46 = vpack.c.b16 %v39, %v38
  %v47 = vpack.c.b16 %v41, %v40
  %v48 = vpack.c.b16 %v43, %v42
  %v49 = vpack.c.b16 %v45, %v44
  %vm54 = vcmask 523264
  %v56 = vsel %vm54, %v29, 0
  %58 = vmatpush.bf16.msra.mxu0 0
  %59 = vmatpush.bf16.msra.mxu0 0
  %60 = vmatpush.bf16.msra.mxu0 0
  %61 = vmatpush.bf16.msra.mxu0 0
  %62 = vmatpush.bf16.msra.mxu0 %v49
  %63 = vmatpush.bf16.msra.mxu0 %v48
  %64 = vmatpush.bf16.msra.mxu0 %v47
  %65 = vmatpush.bf16.msra.mxu0 %v46
  %66 = vmatmul.bf16.gmra.mxu0 %v56
  %v67 = vpop.f32.mrf.mxu0
  %v68 = vadd.f32 0.0, %v67
  %v69 = vpop.f32.mrf.mxu0
  %v70 = vadd.f32 0.0, %v69
  %71 = vdwg.mxu0
  %p72 = scmp.eq.s32.totalorder 0, 0
  // Predicated region
  $region14: #{rgcn_spmv_forward.2} parent=0 // pred_check
    %p73 = pneg %p72
  $region15: #{rgcn_spmv_forward.2} parent=0 // pred_check_branch
    %75 = sbr.rel (%p73) target = $region17
  $region16: #{rgcn_spmv_forward.2} parent=0 // pred_region
    %76 = vst [vmem:[%s3] sm:$0xff] %v68
    %77 = vst [vmem:[%s3 + $0x8] sm:$0xff] %v70
  $region17: #{rgcn_spmv_forward.2} parent=0 // pred_fallthru
    _
  %p78 = scmp.gt.s32.totalorder 0, 0
  // Predicated region
  $region18: #{rgcn_spmv_forward.2} parent=0 // pred_check
    %p79 = pneg %p78
  $region19: #{rgcn_spmv_forward.2} parent=0 // pred_check_branch
    %81 = sbr.rel (%p79) target = $region21
  $region20: #{rgcn_spmv_forward.2} parent=0 // pred_region
    %v82 = vld [vmem:[%s3] sm:$0xff]
    %v83 = vld [vmem:[%s3 + $0x8] sm:$0xff]
    %v84 = vadd.f32 %v82, %v68
    %v85 = vadd.f32 %v83, %v70
    %86 = vst [vmem:[%s3] sm:$0xff] %v84
    %87 = vst [vmem:[%s3 + $0x8] sm:$0xff] %v85
  $region21: #{rgcn_spmv_forward.2} parent=0 // pred_fallthru
    _
  // Predicated region
  $region22: #{rgcn_spmv_forward.2} parent=0 // pred_check
    %p88 = pneg %p72
  $region23: #{rgcn_spmv_forward.2} parent=0 // pred_check_branch
    %90 = sbr.rel (%p88) target = $region25
  $region24: #{rgcn_spmv_forward.2} parent=0 // pred_region
    %v91 = vld [vmem:[%s3] sm:$0xff]
    %v92 = vld [vmem:[%s3 + $0x8] sm:$0xff]
    %v93 = vld [vmem:[%s2] sm:$0xff]
    %v94 = vld [vmem:[%s2 + $0x8] sm:$0xff]
    %v95 = vadd.f32 %v91, %v93
    %v96 = vadd.f32 %v92, %v94
    %v97 = vmax.f32 %v95, 0.0
    %v98 = vmax.f32 %v96, 0.0
    %99 = vst [vmem:[%s3] sm:$0xff] %v97
    %100 = vst [vmem:[%s3 + $0x8] sm:$0xff] %v98
  $region25: #{rgcn_spmv_forward.2} parent=0 // pred_fallthru
    _
  // Predicated region
  $region26: #{rgcn_spmv_forward.2} parent=0 // pred_check
    _
  $region27: #{rgcn_spmv_forward.2} parent=0 // pred_check_branch
    %102 = sbr.rel (0) target = $region29
  $region28: #{rgcn_spmv_forward.2} parent=0 // pred_region
    _
  $region29: #{rgcn_spmv_forward.2} parent=0 // pred_fallthru
    _
  // Predicated region
  $region30: #{rgcn_spmv_forward.2} parent=0 // pred_check
    _
  $region31: #{rgcn_spmv_forward.2} parent=0 // pred_check_branch
    %104 = sbr.rel (0) target = $region33
  $region32: #{rgcn_spmv_forward.2} parent=0 // pred_region
    _
  $region33: #{rgcn_spmv_forward.2} parent=0 // pred_fallthru
    _

// kernel: rgcn_spmv_forward.3
$region0: #{rgcn_spmv_forward.3}
  #allocation0 [shape = 'u32[]', space=smem, size = 0x4, offset = 0x4, fixed_abs, tag = 'smem constant byte address 0x4 - core index']
  #allocation1 [shape = 'u32[72,128]{1,0:T(1,128)}', space=vmem, size = 0x9000, scoped, tag = 'internal scratch']
  %s0 = inlined_call_operand.vmem [shape: bf16[16,64], index: 0, kind: input, shape index: {}]
  %s1 = inlined_call_operand.vmem [shape: bf16[64,128], index: 1, kind: input, shape index: {}]
  %s2 = inlined_call_operand.vmem [shape: f32[16,128], index: 2, kind: input, shape index: {}]
  %s3 = inlined_call_operand.vmem [shape: f32[16,128], index: 3, kind: output, shape index: {}]
  %s4 = sld [smem:[#allocation0]]
  $region34: #{rgcn_spmv_forward.3} parent=0
    _
  %s6 = ssub.s32 1, %s4
  %s7 = scalar_select 0, %s6, %s4
  // Predicated region
  $region2: #{rgcn_spmv_forward.3} parent=0 // pred_check
    _
  $region3: #{rgcn_spmv_forward.3} parent=0 // pred_check_branch
    %9 = sbr.rel (0) target = $region5
  $region4: #{rgcn_spmv_forward.3} parent=0 // pred_region
    _
  $region5: #{rgcn_spmv_forward.3} parent=0 // pred_fallthru
    _
  // Predicated region
  $region6: #{rgcn_spmv_forward.3} parent=0 // pred_check
    _
  $region7: #{rgcn_spmv_forward.3} parent=0 // pred_check_branch
    %11 = sbr.rel (0) target = $region9
  $region8: #{rgcn_spmv_forward.3} parent=0 // pred_region
    _
  $region9: #{rgcn_spmv_forward.3} parent=0 // pred_fallthru
    _
  // Predicated region
  $region10: #{rgcn_spmv_forward.3} parent=0 // pred_check
    _
  $region11: #{rgcn_spmv_forward.3} parent=0 // pred_check_branch
    %13 = sbr.rel (0) target = $region13
  $region12: #{rgcn_spmv_forward.3} parent=0 // pred_region
    _
  $region13: #{rgcn_spmv_forward.3} parent=0 // pred_fallthru
    _
  %v15 = vld [vmem:[%s0] sm:$0xf]
  %v16 = vld [vmem:[%s0 + $0x4] sm:$0xf]
  %v17 = vld [vmem:[%s1] sm:$0xf]
  %v18 = vld [vmem:[%s1 + $0x4] sm:$0xf]
  %v19 = vld [vmem:[%s1 + $0x8] sm:$0xf]
  %v20 = vld [vmem:[%s1 + $0xc] sm:$0xf]
  %v21 = vld [vmem:[%s1 + $0x10] sm:$0xf]
  %v22 = vld [vmem:[%s1 + $0x14] sm:$0xf]
  %v23 = vld [vmem:[%s1 + $0x18] sm:$0xf]
  %v24 = vld [vmem:[%s1 + $0x1c] sm:$0xf]
  %v27 = vunpack.c.l.b16 %v15
  %v28 = vunpack.c.l.b16 %v16
  %v29 = vpack.c.b16 %v28, %v27
  %v38 = vunpack.c.l.b16 %v17
  %v39 = vunpack.c.l.b16 %v18
  %v40 = vunpack.c.l.b16 %v19
  %v41 = vunpack.c.l.b16 %v20
  %v42 = vunpack.c.l.b16 %v21
  %v43 = vunpack.c.l.b16 %v22
  %v44 = vunpack.c.l.b16 %v23
  %v45 = vunpack.c.l.b16 %v24
  %v46 = vpack.c.b16 %v39, %v38
  %v47 = vpack.c.b16 %v41, %v40
  %v48 = vpack.c.b16 %v43, %v42
  %v49 = vpack.c.b16 %v45, %v44
  %vm54 = vcmask 523264
  %v56 = vsel %vm54, %v29, 0
  %58 = vmatpush.bf16.msra.mxu0 0
  %59 = vmatpush.bf16.msra.mxu0 0
  %60 = vmatpush.bf16.msra.mxu0 0
  %61 = vmatpush.bf16.msra.mxu0 0
  %62 = vmatpush.bf16.msra.mxu0 %v49
  %63 = vmatpush.bf16.msra.mxu0 %v48
  %64 = vmatpush.bf16.msra.mxu0 %v47
  %65 = vmatpush.bf16.msra.mxu0 %v46
  %66 = vmatmul.bf16.gmra.mxu0 %v56
  %v67 = vpop.f32.mrf.mxu0
  %v68 = vadd.f32 0.0, %v67
  %v69 = vpop.f32.mrf.mxu0
  %v70 = vadd.f32 0.0, %v69
  %71 = vdwg.mxu0
  %p72 = scmp.eq.s32.totalorder 0, 0
  // Predicated region
  $region14: #{rgcn_spmv_forward.3} parent=0 // pred_check
    %p73 = pneg %p72
  $region15: #{rgcn_spmv_forward.3} parent=0 // pred_check_branch
    %75 = sbr.rel (%p73) target = $region17
  $region16: #{rgcn_spmv_forward.3} parent=0 // pred_region
    %76 = vst [vmem:[%s3] sm:$0xff] %v68
    %77 = vst [vmem:[%s3 + $0x8] sm:$0xff] %v70
  $region17: #{rgcn_spmv_forward.3} parent=0 // pred_fallthru
    _
  %p78 = scmp.gt.s32.totalorder 0, 0
  // Predicated region
  $region18: #{rgcn_spmv_forward.3} parent=0 // pred_check
    %p79 = pneg %p78
  $region19: #{rgcn_spmv_forward.3} parent=0 // pred_check_branch
    %81 = sbr.rel (%p79) target = $region21
  $region20: #{rgcn_spmv_forward.3} parent=0 // pred_region
    %v82 = vld [vmem:[%s3] sm:$0xff]
    %v83 = vld [vmem:[%s3 + $0x8] sm:$0xff]
    %v84 = vadd.f32 %v82, %v68
    %v85 = vadd.f32 %v83, %v70
    %86 = vst [vmem:[%s3] sm:$0xff] %v84
    %87 = vst [vmem:[%s3 + $0x8] sm:$0xff] %v85
  $region21: #{rgcn_spmv_forward.3} parent=0 // pred_fallthru
    _
  // Predicated region
  $region22: #{rgcn_spmv_forward.3} parent=0 // pred_check
    %p88 = pneg %p72
  $region23: #{rgcn_spmv_forward.3} parent=0 // pred_check_branch
    %90 = sbr.rel (%p88) target = $region25
  $region24: #{rgcn_spmv_forward.3} parent=0 // pred_region
    %v91 = vld [vmem:[%s3] sm:$0xff]
    %v92 = vld [vmem:[%s3 + $0x8] sm:$0xff]
    %v93 = vld [vmem:[%s2] sm:$0xff]
    %v94 = vld [vmem:[%s2 + $0x8] sm:$0xff]
    %v95 = vadd.f32 %v91, %v93
    %v96 = vadd.f32 %v92, %v94
    %v97 = vlaneseq
    %v98 = vand.u32 %v97, 127
    %vm99 = vcmp.lt.s32.totalorder %v98, 8
    %v100 = vsel %vm99, %v95, -inf
    %v101 = vsel %vm99, %v96, -inf
    %102 = vmax.xlane.f32.xlu0 %v100
    %v103 = vpop.xlane.xlu0 %102
    %104 = vmax.xlane.f32.xlu0 %v101
    %v105 = vpop.xlane.xlu0 %104
    %v106 = vsub.f32 %v100, %v103
    %v107 = vsub.f32 %v101, %v105
    %v108 = vmul.f32 %v106, 1.442695
    %v109 = vpow.pop %v108
    %v110 = vmul.f32 %v107, 1.442695
    %v111 = vpow.pop %v110
    %112 = vadd.xlane.f32.xlu0 %v109
    %v113 = vpop.xlane.xlu0 %112
    %114 = vadd.xlane.f32.xlu0 %v111
    %v115 = vpop.xlane.xlu0 %114
    %v116 = vlog2.pop %v113
    %v117 = vmul.f32 %v116, 0.6931472
    %v118 = vlog2.pop %v115
    %v119 = vmul.f32 %v118, 0.6931472
    %v120 = vsub.f32 %v106, %v117
    %v121 = vsub.f32 %v107, %v119
    %122 = vst [vmem:[%s3] sm:$0xff] %v120
    %123 = vst [vmem:[%s3 + $0x8] sm:$0xff] %v121
  $region25: #{rgcn_spmv_forward.3} parent=0 // pred_fallthru
    _
  // Predicated region
  $region26: #{rgcn_spmv_forward.3} parent=0 // pred_check
    _
  $region27: #{rgcn_spmv_forward.3} parent=0 // pred_check_branch
    %125 = sbr.rel (0) target = $region29
  $region28: #{rgcn_spmv_forward.3} parent=0 // pred_region
    _
  $region29: #{rgcn_spmv_forward.3} parent=0 // pred_fallthru
    _
  // Predicated region
  $region30: #{rgcn_spmv_forward.3} parent=0 // pred_check
    _
  $region31: #{rgcn_spmv_forward.3} parent=0 // pred_check_branch
    %127 = sbr.rel (0) target = $region33
  $region32: #{rgcn_spmv_forward.3} parent=0 // pred_region
    _
  $region33: #{rgcn_spmv_forward.3} parent=0 // pred_fallthru
    _

</llo_original>
